<compile_context>
chip_gen: v7x
topology: tpu7x:2x2x1
jax: 0.10.0
libtpu: 0.0.40
codegen_flags: <defaults>
</compile_context>

<pallas_src>
import functools

import jax
import jax.numpy as jnp
from jax.experimental import pallas as pl
from jax.experimental.pallas import tpu as pltpu


def _round_up(v, m):
    return (v + m - 1) // m * m


def _query_vmem_limit():
    """Generation-aware scoped-VMEM limit: half of physical VMEM, capped at 64 MiB.
    v5e/v6e (128 MiB physical, single TC) -> 64 MiB; v7x (64 MiB per TC) -> 32 MiB."""
    try:
        cap = int(pltpu.get_tpu_info().vmem_capacity_bytes)
    except Exception:
        cap = 64 * 1024 * 1024
    return max(16 * 1024 * 1024, min(cap // 2, 64 * 1024 * 1024))


_VMEM_LIMIT = _query_vmem_limit()
_TILE_BUDGET = _VMEM_LIMIT // 3       # per-grid-step byte budget (double-buffered I/O + scratch)
_ELEMWISE_TILE_CAP = 1024             # mem-bound modes: big tiles amortize ~0.35us/step overhead
_LSTM_TILE_CAP = 512                  # keep recurrence state + (K,T,8H) scratch in check


def _pick_tile(rows, row_bytes, cap):
    tile = cap
    while tile > 8 and tile * row_bytes > _TILE_BUDGET:
        tile //= 2
    return max(8, min(tile, _round_up(rows, 8)))


def _lane_dense_list(xs):
    """Reshape each (N, d) layer to (N*d/128, 128) when the K-reduction is elementwise.

    Row-major reshape of a contiguous array -> free (no HBM copy).  Falls back to the
    original (N, d) layout (masked lane stores) when (N*d) % 128 != 0 -- perf only, not a bug.
    """
    N, d = xs[0].shape
    if d % 128 != 0 and (N * d) % 128 == 0:
        return [x.reshape((N * d) // 128, 128) for x in xs]
    return list(xs)


# ----------------------------------------------------------------------------- kernels

def _reduce_kernel(*refs, op, K):
    """max / mean over K per-layer refs.  refs: K x (T, L), out (T, L)."""
    x_refs, o_ref = refs[:K], refs[K]
    if op == "max":
        acc = x_refs[0][...]
        for k in range(1, K):
            acc = jnp.maximum(acc, x_refs[k][...])
        o_ref[...] = acc.astype(o_ref.dtype)
    else:  # mean -- accumulate in f32 (bf16-safe)
        acc = x_refs[0][...].astype(jnp.float32)
        for k in range(1, K):
            acc = acc + x_refs[k][...].astype(jnp.float32)
        o_ref[...] = (acc * (1.0 / K)).astype(o_ref.dtype)


def _weighted_sum_kernel(*refs, K):
    """out = sum_k w[k] * x_k.  w: (K,) f32 in SMEM, already softmax'd / tanh'd."""
    x_refs, w_ref, o_ref = refs[:K], refs[K], refs[K + 1]
    acc = w_ref[0] * x_refs[0][...].astype(jnp.float32)
    for k in range(1, K):                              # K is small & static -> unrolled
        acc = acc + w_ref[k] * x_refs[k][...].astype(jnp.float32)
    o_ref[...] = acc.astype(o_ref.dtype)


def _node_adaptive_kernel(*refs, K):
    """out = sum_k tanh(<x_k, s>) * x_k per node.  x_k: (T, d), s: (1, d)."""
    x_refs, s_ref, o_ref = refs[:K], refs[K], refs[K + 1]
    s = s_ref[...].astype(jnp.float32)                 # (1, d), resident across the grid
    acc = jnp.zeros(o_ref.shape, jnp.float32)
    for k in range(K):
        xk = x_refs[k][...].astype(jnp.float32)        # (T, d)
        # VPU multiply + XLU lane reduce (no width-1 MXU matvec); HBM-bound either way.
        t = jnp.sum(xk * s, axis=-1, keepdims=True)    # (T, 1)
        acc = acc + jnp.tanh(t) * xk
    o_ref[...] = acc.astype(o_ref.dtype)


def _lstm_jk_kernel(*refs, K, H):
    """Bidirectional single-layer LSTM over the K layer axis + attention pooling.

    refs: K x x_k (T, C),
          wih_all (C, 8H)  = [W_ih_fwd | W_ih_bwd] in the input dtype,
          whh_f (H, 4H), whh_b (H, 4H),
          b_all (1, 8H) f32 = [b_fwd | b_bwd] (b_ih + b_hh folded),
          waf (1, H), wab (1, H) halves of Linear(2H, 1).weight, batt (1, 1),
          o_ref (T, C),
          scratch: gxf/gxb (K, T, 4H) f32 hoisted input projections,
                   hf (K, T, H) f32 forward hidden states,
                   af (K, T, 1) f32 forward attention logit contributions.
    Gate packing follows PyTorch order [i, f, g, o].
    """
    x_refs = refs[:K]
    wih, whh_f, whh_b, b_all, waf, wab, batt = refs[K:K + 7]
    o_ref = refs[K + 7]
    gxf_ref, gxb_ref, hf_ref, af_ref = refs[K + 8:K + 12]

    f32 = jnp.float32
    T, C = x_refs[0].shape

    # Hoisted, direction-packed input projection: one MXU matmul per layer slice (was 2K).
    # Operands stay in the input dtype (bf16 inputs run the fast MXU path).
    w = wih[...]
    b = b_all[...].astype(f32)                         # (1, 8H)
    for k in range(K):
        g = jnp.dot(x_refs[k][...], w, preferred_element_type=f32) + b    # (T, 8H) f32
        gxf_ref[k] = g[:, :4 * H]
        gxb_ref[k] = g[:, 4 * H:]

    whhf = whh_f[...]
    whhb = whh_b[...]
    mm_dtype = whhf.dtype

    def cell(gx, h, c, whh):
        # TODO(synk): gate slices are not 128-lane aligned for small H; for production sizes
        # pad H to a multiple of 128 wrapper-side so each slice is a free lane-aligned view.
        gates = gx + jnp.dot(h.astype(mm_dtype), whh, preferred_element_type=f32)
        i = jax.nn.sigmoid(gates[:, 0 * H:1 * H])
        f = jax.nn.sigmoid(gates[:, 1 * H:2 * H])
        g = jnp.tanh(gates[:, 2 * H:3 * H])
        o = jax.nn.sigmoid(gates[:, 3 * H:4 * H])
        c = f * c + i * g
        h = o * jnp.tanh(c)
        return h, c

    # Forward direction: stash hidden states; attention logits computed batched afterwards
    # (no per-step XLU reduce / 1-lane masked store on the serial recurrence path).
    h = jnp.zeros((T, H), f32)
    c = jnp.zeros((T, H), f32)
    for t in range(K):
        h, c = cell(gxf_ref[t], h, c, whhf)
        hf_ref[t] = h
    af_ref[...] = jnp.sum(hf_ref[...] * waf[...].astype(f32), axis=-1, keepdims=True)

    # Backward direction fused with online-softmax attention pooling.
    wab_v = wab[...].astype(f32)                       # (1, H)
    b_att = batt[...].astype(f32)                      # (1, 1)
    h = jnp.zeros((T, H), f32)
    c = jnp.zeros((T, H), f32)
    m = jnp.full((T, 1), -jnp.inf, f32)
    z = jnp.zeros((T, 1), f32)
    acc = jnp.zeros((T, C), f32)
    for t in range(K - 1, -1, -1):
        h, c = cell(gxb_ref[t], h, c, whhb)
        logit = af_ref[t] + jnp.sum(h * wab_v, axis=-1, keepdims=True) + b_att
        m_new = jnp.maximum(m, logit)
        scale = jnp.exp(m - m_new)
        p = jnp.exp(logit - m_new)
        z = scale * z + p
        acc = scale * acc + p * x_refs[t][...].astype(f32)
        m = m_new
    o_ref[...] = (acc / z).astype(o_ref.dtype)


# ----------------------------------------------------------------------------- wrapper

def _call_rowtiled(kernel, xs, params=(), out_dtype=None, scratch_fn=None,
                   extra_row_bytes=0, tile_cap=_ELEMWISE_TILE_CAP):
    """Row-tile K per-layer arrays xs[k]: (R, L) over a 1-D grid; no stacking, no padding.

    params: sequence of (array, space) with space in {"vmem", "smem"}; small "vmem" params use
    a constant index_map so they are DMA'd once and stay resident.  Returns an (R, L) array.
    The last grid block may be ragged; Pallas masks out-of-bounds stores and every mode is
    row-independent, so garbage rows in the partial input block never reach a stored row.
    """
    K = len(xs)
    R, L = xs[0].shape
    out_dtype = out_dtype or xs[0].dtype
    row_bytes = 2 * (sum(a.dtype.itemsize for a in xs) * L
                     + L * jnp.dtype(out_dtype).itemsize)        # double-buffered in/out
    tile = _pick_tile(R, row_bytes + extra_row_bytes, tile_cap)

    in_specs = [pl.BlockSpec((tile, L), lambda i: (i, 0)) for _ in range(K)]
    args = list(xs)
    for arr, space in params:
        if space == "smem":
            in_specs.append(pl.BlockSpec(memory_space=pltpu.MemorySpace.SMEM))
        else:
            in_specs.append(pl.BlockSpec(arr.shape, lambda i, nd=arr.ndim: (0,) * nd))
        args.append(arr)

    return pl.pallas_call(
        kernel,
        out_shape=jax.ShapeDtypeStruct((R, L), out_dtype),
        grid=(pl.cdiv(R, tile),),
        in_specs=in_specs,
        out_specs=pl.BlockSpec((tile, L), lambda i: (i, 0)),
        scratch_shapes=list(scratch_fn(tile)) if scratch_fn is not None else [],
        compiler_params=pltpu.CompilerParams(
            dimension_semantics=("parallel",),   # megacore-sharded on v7x; neutral on v5e/v6e
            vmem_limit_bytes=_VMEM_LIMIT),
    )(*args)


class JumpingKnowledgePallas:
    """JAX/Pallas port of the PyTorch JumpingKnowledge module (forward only)."""

    def __init__(self, mode, channels=None, num_layers=None, K=None, seed=0):
        self.mode = mode.lower()
        assert self.mode in ["concat", "last", "max", "mean", "att", "gpr",
                             "lstm", "node_adaptive"]
        self.channels = channels
        self.K = K
        key = jax.random.PRNGKey(seed)

        if self.mode in ("att", "gpr"):
            assert K is not None
            bound = (3.0 / (K + 1)) ** 0.5
            temp = jax.random.uniform(key, (K + 1,), jnp.float32, 0.0, bound)
            self.scores = temp / jnp.sum(jnp.abs(temp))          # (K+1,)

        if self.mode == "node_adaptive":
            assert channels is not None
            a = (6.0 / (channels + 1)) ** 0.5                    # xavier_uniform for (1, C)
            self.s = jax.random.uniform(key, (1, channels), jnp.float32, -a, a)

        if self.mode == "lstm":
            assert channels is not None and num_layers is not None
            H = num_layers * channels // 2
            self.H = H
            stdv = 1.0 / (H ** 0.5)
            ks = jax.random.split(key, 10)
            u = lambda k, shape, b: jax.random.uniform(k, shape, jnp.float32, -b, b)
            # weights stored pre-transposed for (T,C)@(C,4H) matmuls; gate order [i,f,g,o]
            self.wih_f = u(ks[0], (channels, 4 * H), stdv)
            self.whh_f = u(ks[1], (H, 4 * H), stdv)
            self.b_f = u(ks[2], (1, 4 * H), stdv) + u(ks[3], (1, 4 * H), stdv)  # b_ih+b_hh
            self.wih_b = u(ks[4], (channels, 4 * H), stdv)
            self.whh_b = u(ks[5], (H, 4 * H), stdv)
            self.b_b = u(ks[6], (1, 4 * H), stdv) + u(ks[7], (1, 4 * H), stdv)
            ab = 1.0 / ((2 * H) ** 0.5)
            att_w = u(ks[8], (1, 2 * H), ab)                     # Linear(2H, 1).weight
            self.w_att_f = att_w[:, :H]                          # (1, H)
            self.w_att_b = att_w[:, H:]                          # (1, H)
            self.b_att = u(ks[9], (1, 1), ab)                    # Linear(2H, 1).bias

    def __call__(self, xs):
        if self.mode == "last":
            return xs[-1]                                        # pure selection, no kernel
        if self.mode == "concat":
            return jnp.concatenate(xs, axis=-1)                  # pure data movement

        K = len(xs)
        N, d = xs[0].shape

        if self.mode in ("max", "mean"):
            xd = _lane_dense_list(xs)
            out = _call_rowtiled(functools.partial(_reduce_kernel, op=self.mode, K=K), xd)
            return out.reshape(N, d)

        if self.mode in ("att", "gpr"):
            assert K == self.scores.shape[0]
            w = (jax.nn.softmax(self.scores) if self.mode == "att"
                 else jnp.tanh(self.scores))                     # transform once, wrapper-side
            xd = _lane_dense_list(xs)
            out = _call_rowtiled(functools.partial(_weighted_sum_kernel, K=K), xd,
                                 params=[(w, "smem")], out_dtype=xs[0].dtype)
            return out.reshape(N, d)

        if self.mode == "node_adaptive":
            return _call_rowtiled(functools.partial(_node_adaptive_kernel, K=K),
                                  list(xs), params=[(self.s, "vmem")])

        if self.mode == "lstm":
            H = self.H
            xdt = xs[0].dtype
            # Pack the two direction input projections: one (C, 8H) weight, one (1, 8H) bias.
            wih_all = jnp.concatenate([self.wih_f, self.wih_b], axis=1).astype(xdt)
            b_all = jnp.concatenate([self.b_f, self.b_b], axis=1)                 # f32
            params = [(wih_all, "vmem"),
                      (self.whh_f.astype(xdt), "vmem"), (self.whh_b.astype(xdt), "vmem"),
                      (b_all, "vmem"),
                      (self.w_att_f, "vmem"), (self.w_att_b, "vmem"), (self.b_att, "vmem")]
            # scratch bytes per row: gxf + gxb (2*4H) + hf (H) + af (1), all f32, per layer
            extra = K * (8 * H + H + 1) * 4
            scratch_fn = lambda tile: (
                pltpu.VMEM((K, tile, 4 * H), jnp.float32),       # gxf
                pltpu.VMEM((K, tile, 4 * H), jnp.float32),       # gxb
                pltpu.VMEM((K, tile, H), jnp.float32),           # hf
                pltpu.VMEM((K, tile, 1), jnp.float32),           # af
            )
            return _call_rowtiled(functools.partial(_lstm_jk_kernel, K=K, H=H),
                                  list(xs), params=params, scratch_fn=scratch_fn,
                                  extra_row_bytes=extra, tile_cap=_LSTM_TILE_CAP)
        raise NotImplementedError


# ----------------------------------------------------------------------------- reference

def _ref_forward(m, xs):
    """Pure-JAX reference reproducing the PyTorch forward semantics."""
    x = jnp.stack(xs, axis=0)                                    # (K, N, d)
    if m.mode == "max":
        return jnp.max(x, axis=0)
    if m.mode == "mean":
        return jnp.mean(x, axis=0)
    if m.mode == "att":
        return jnp.einsum("k,knd->nd", jax.nn.softmax(m.scores), x)
    if m.mode == "gpr":
        return jnp.einsum("k,knd->nd", jnp.tanh(m.scores), x)
    if m.mode == "node_adaptive":
        scores = jnp.tanh(jnp.einsum("knd,id->kn", x, m.s))
        return jnp.einsum("knd,kn->nd", x, scores)
    if m.mode == "lstm":
        K, N, _ = x.shape
        H = m.H

        def run_dir(order, wih, whh, b):
            h = jnp.zeros((N, H)); c = jnp.zeros((N, H)); hs = {}
            for t in order:
                g = x[t] @ wih + h @ whh + b
                i = jax.nn.sigmoid(g[:, :H]); f = jax.nn.sigmoid(g[:, H:2 * H])
                gg = jnp.tanh(g[:, 2 * H:3 * H]); o = jax.nn.sigmoid(g[:, 3 * H:])
                c = f * c + i * gg
                h = o * jnp.tanh(c)
                hs[t] = h
            return hs

        hf = run_dir(range(K), m.wih_f, m.whh_f, m.b_f)
        hb = run_dir(range(K - 1, -1, -1), m.wih_b, m.whh_b, m.b_b)
        logits = jnp.concatenate(
            [hf[t] @ m.w_att_f.T + hb[t] @ m.w_att_b.T for t in range(K)], axis=1
        ) + m.b_att[0, 0]                                        # (N, K)
        alpha = jax.nn.softmax(logits, axis=-1)
        return jnp.einsum("nk,knd->nd", alpha, x)
    raise NotImplementedError


# ----------------------------------------------------------------------------- main

if __name__ == "__main__":
    def make_xs(n, d, layers, k):
        return [jax.random.normal(kk, (n, d), jnp.float32)
                for kk in jax.random.split(k, layers)]

    N, d, L = 64, 32, 4                    # nodes, channels, number of stacked layers
    xs = make_xs(N, d, L, jax.random.PRNGKey(0))

    # trivial modes (no kernel: pure selection / data movement)
    assert JumpingKnowledgePallas("last")(xs).shape == (N, d)
    assert JumpingKnowledgePallas("concat")(xs).shape == (N, d * L)

    configs = [
        ("max", {}),
        ("mean", {}),
        ("att", {"K": L - 1}),
        ("gpr", {"K": L - 1}),
        ("node_adaptive", {"channels": d}),
        ("lstm", {"channels": d, "num_layers": 1}),
    ]
    for mode, kw in configs:
        jk = JumpingKnowledgePallas(mode, **kw)
        out = jax.block_until_ready(jk(xs))
        ref = jax.block_until_ready(_ref_forward(jk, xs))
        assert out.shape == (N, d), (mode, out.shape)
        err = float(jnp.max(jnp.abs(out - ref)))
        assert err < 1e-2, (mode, err)

    # larger shapes: exercise multi-tile grids and ragged (masked) last blocks
    big_cases = [
        ("mean", {}, 4104, 32, 4),
        ("att", {"K": 3}, 4104, 32, 4),
        ("lstm", {"channels": 32, "num_layers": 1}, 1032, 32, 4),
    ]
    for mode, kw, n2, d2, l2 in big_cases:
        xs2 = make_xs(n2, d2, l2, jax.random.PRNGKey(1))
        jk = JumpingKnowledgePallas(mode, **kw)
        out = jax.block_until_ready(jk(xs2))
        ref = jax.block_until_ready(_ref_forward(jk, xs2))
        assert out.shape == (n2, d2), (mode, out.shape)
        err = float(jnp.max(jnp.abs(out - ref)))
        assert err < 1e-2, (mode, err)

    print("KERNEL_OK")
</pallas_src>

<mosaic_0001>
module attributes {stable_mosaic.version = 11 : i64} {
  func.func @_reduce_kernel(%arg0: i32, %arg1: memref<16x128xf32, #tpu.memory_space<vmem>>, %arg2: memref<16x128xf32, #tpu.memory_space<vmem>>, %arg3: memref<16x128xf32, #tpu.memory_space<vmem>>, %arg4: memref<16x128xf32, #tpu.memory_space<vmem>>, %arg5: memref<16x128xf32, #tpu.memory_space<vmem>>) attributes {dimension_semantics = [#tpu.dimension_semantics<parallel>], iteration_bounds = array<i64: 1>, scalar_prefetch = 0 : i64, scratch_operands = 0 : i64, tpu.core_type = #tpu.core_type<tc>, window_params = [{transform_indices = @transform_0, window_bounds = array<i64: 16, 128>}, {transform_indices = @transform_1, window_bounds = array<i64: 16, 128>}, {transform_indices = @transform_2, window_bounds = array<i64: 16, 128>}, {transform_indices = @transform_3, window_bounds = array<i64: 16, 128>}, {transform_indices = @transform_4, window_bounds = array<i64: 16, 128>}]} {
    %c0 = arith.constant 0 : index
    %c0_0 = arith.constant 0 : index
    %0 = vector.load %arg1[%c0, %c0_0] : memref<16x128xf32, #tpu.memory_space<vmem>>, vector<16x128xf32>
    %c0_1 = arith.constant 0 : index
    %c0_2 = arith.constant 0 : index
    %1 = vector.load %arg2[%c0_1, %c0_2] : memref<16x128xf32, #tpu.memory_space<vmem>>, vector<16x128xf32>
    %2 = arith.maximumf %0, %1 : vector<16x128xf32>
    %c0_3 = arith.constant 0 : index
    %c0_4 = arith.constant 0 : index
    %3 = vector.load %arg3[%c0_3, %c0_4] : memref<16x128xf32, #tpu.memory_space<vmem>>, vector<16x128xf32>
    %4 = arith.maximumf %2, %3 : vector<16x128xf32>
    %c0_5 = arith.constant 0 : index
    %c0_6 = arith.constant 0 : index
    %5 = vector.load %arg4[%c0_5, %c0_6] : memref<16x128xf32, #tpu.memory_space<vmem>>, vector<16x128xf32>
    %6 = arith.maximumf %4, %5 : vector<16x128xf32>
    %c0_7 = arith.constant 0 : index
    %c0_8 = arith.constant 0 : index
    %7 = vector.load %arg5[%c0_7, %c0_8] : memref<16x128xf32, #tpu.memory_space<vmem>>, vector<16x128xf32>
    tpu.vector_store %arg5[%c0_7, %c0_8], %6 {strides = array<i32>} : memref<16x128xf32, #tpu.memory_space<vmem>>, vector<16x128xf32>,
    return
  }
  func.func @transform_0(%arg0: i32) -> (i32, i32) {
    %c0_i32 = arith.constant 0 : i32
    %c0_i32_0 = arith.constant 0 : i32
    return %arg0, %c0_i32 : i32, i32
  }
  func.func @transform_1(%arg0: i32) -> (i32, i32) {
    %c0_i32 = arith.constant 0 : i32
    %c0_i32_0 = arith.constant 0 : i32
    return %arg0, %c0_i32 : i32, i32
  }
  func.func @transform_2(%arg0: i32) -> (i32, i32) {
    %c0_i32 = arith.constant 0 : i32
    %c0_i32_0 = arith.constant 0 : i32
    return %arg0, %c0_i32 : i32, i32
  }
  func.func @transform_3(%arg0: i32) -> (i32, i32) {
    %c0_i32 = arith.constant 0 : i32
    %c0_i32_0 = arith.constant 0 : i32
    return %arg0, %c0_i32 : i32, i32
  }
  func.func @transform_4(%arg0: i32) -> (i32, i32) {
    %c0_i32 = arith.constant 0 : i32
    %c0_i32_0 = arith.constant 0 : i32
    return %arg0, %c0_i32 : i32, i32
  }
}

</mosaic_0001>

<llo_original>
// kernel: tpu_custom_call.1
$region0: #{tpu_custom_call.1}
  #allocation0 [shape = 'u32[]', space=smem, size = 0x4, offset = 0x4, fixed_abs, tag = 'smem constant byte address 0x4 - core index']
  #allocation1 [shape = 'u32[144,128]{1,0:T(1,128)}', space=vmem, size = 0x12000, scoped, tag = 'internal scratch']
  %s0 = inlined_call_operand.hbm [shape: f32[16,128], index: 0, kind: input, shape index: {}]
  %s1 = inlined_call_operand.hbm [shape: f32[16,128], index: 1, kind: input, shape index: {}]
  %s2 = inlined_call_operand.hbm [shape: f32[16,128], index: 2, kind: input, shape index: {}]
  %s3 = inlined_call_operand.hbm [shape: f32[16,128], index: 3, kind: input, shape index: {}]
  %s4 = inlined_call_operand.hbm [shape: f32[16,128], index: 4, kind: output, shape index: {}]
  %s5 = sld [smem:[#allocation0]]
  $region42: #{tpu_custom_call.1} parent=0
    _
  %s7 = ssub.s32 1, %s5
  %s8 = scalar_select 0, %s7, %s5
  $region1: #{tpu_custom_call.1} parent=0
    #allocation2 [shape = 'u8[8192]{0}', space=vmem, size = 0x2000, scoped, tag = 'input window, operand 0, single buffered']
    #allocation3 [shape = 's32[1]{0}', space=sflag, size = 0x4, scoped, tag = 'scoped memory for tpu_custom_call.1']
    #allocation4 [shape = 's32[1]{0}', space=sflag, size = 0x4, scoped, tag = 'scoped memory for tpu_custom_call.1']
    #allocation5 [shape = 'u8[8192]{0}', space=vmem, size = 0x2000, scoped, tag = 'input window, operand 1, single buffered']
    #allocation6 [shape = 's32[1]{0}', space=sflag, size = 0x4, scoped, tag = 'scoped memory for tpu_custom_call.1']
    #allocation7 [shape = 'u8[8192]{0}', space=vmem, size = 0x2000, scoped, tag = 'input window, operand 2, single buffered']
    #allocation8 [shape = 'u8[8192]{0}', space=vmem, size = 0x2000, scoped, tag = 'input window, operand 3, single buffered']
    #allocation9 [shape = 's32[1]{0}', space=sflag, size = 0x4, scoped, tag = 'scoped memory for tpu_custom_call.1']
    #allocation10 [shape = 'u8[8192]{0}', space=vmem, size = 0x2000, scoped, tag = 'output window, operand 0, single buffered']
    %9 = vsyncpa [#allocation3], 0
    %10 = vsyncpa [#allocation6], 0
    %11 = vsyncpa [#allocation9], 0
    %12 = vsyncpa [#allocation4], 0
    // Predicated region
    $region2: #{tpu_custom_call.1} parent=1 // pred_check
      _
    $region3: #{tpu_custom_call.1} parent=1 // pred_check_branch
      %14 = sbr.rel (0) target = $region5
    $region4: #{tpu_custom_call.1} parent=1 // pred_region
      %s16 = ssub.s32 256, 256
      %17 = vsyncadd [#allocation3], %s16
      %s18 = sshll.u32 [#allocation2], 4
      %s19 = int_to_ptr.vmem [resolvable:$true] %s18
      %24 = dma.hbm_to_vmem [thread:$0]  %s0, 256, %s19, [#allocation3], 128, 128, 8
    $region5: #{tpu_custom_call.1} parent=1 // pred_fallthru
      _
    // Predicated region
    $region6: #{tpu_custom_call.1} parent=1 // pred_check
      _
    $region7: #{tpu_custom_call.1} parent=1 // pred_check_branch
      %26 = sbr.rel (0) target = $region9
    $region8: #{tpu_custom_call.1} parent=1 // pred_region
      %s28 = ssub.s32 256, 256
      %29 = vsyncadd [#allocation6], %s28
      %s30 = sshll.u32 [#allocation5], 4
      %s31 = int_to_ptr.vmem [resolvable:$true] %s30
      %36 = dma.hbm_to_vmem [thread:$0]  %s1, 256, %s31, [#allocation6], 128, 128, 8
    $region9: #{tpu_custom_call.1} parent=1 // pred_fallthru
      _
    // Predicated region
    $region10: #{tpu_custom_call.1} parent=1 // pred_check
      _
    $region11: #{tpu_custom_call.1} parent=1 // pred_check_branch
      %38 = sbr.rel (0) target = $region13
    $region12: #{tpu_custom_call.1} parent=1 // pred_region
      %s40 = ssub.s32 256, 256
      %41 = vsyncadd [#allocation6], %s40
      %s42 = sshll.u32 [#allocation7], 4
      %s43 = int_to_ptr.vmem [resolvable:$true] %s42
      %48 = dma.hbm_to_vmem [thread:$0]  %s2, 256, %s43, [#allocation6], 128, 128, 8
    $region13: #{tpu_custom_call.1} parent=1 // pred_fallthru
      _
    // Predicated region
    $region14: #{tpu_custom_call.1} parent=1 // pred_check
      _
    $region15: #{tpu_custom_call.1} parent=1 // pred_check_branch
      %50 = sbr.rel (0) target = $region17
    $region16: #{tpu_custom_call.1} parent=1 // pred_region
      %s52 = ssub.s32 256, 256
      %53 = vsyncadd [#allocation9], %s52
      %s54 = sshll.u32 [#allocation8], 4
      %s55 = int_to_ptr.vmem [resolvable:$true] %s54
      %60 = dma.hbm_to_vmem [thread:$0]  %s3, 256, %s55, [#allocation9], 128, 128, 8
    $region17: #{tpu_custom_call.1} parent=1 // pred_fallthru
      _
    // Predicated region
    $region18: #{tpu_custom_call.1} parent=1 // pred_check
      _
    $region19: #{tpu_custom_call.1} parent=1 // pred_check_branch
      %62 = sbr.rel (0) target = $region21
    $region20: #{tpu_custom_call.1} parent=1 // pred_region
      %63 = dma.done [#allocation3], 256
    $region21: #{tpu_custom_call.1} parent=1 // pred_fallthru
      _
    // Predicated region
    $region22: #{tpu_custom_call.1} parent=1 // pred_check
      _
    $region23: #{tpu_custom_call.1} parent=1 // pred_check_branch
      %65 = sbr.rel (0) target = $region25
    $region24: #{tpu_custom_call.1} parent=1 // pred_region
      %66 = dma.done [#allocation6], 256
    $region25: #{tpu_custom_call.1} parent=1 // pred_fallthru
      _
    // Predicated region
    $region26: #{tpu_custom_call.1} parent=1 // pred_check
      _
    $region27: #{tpu_custom_call.1} parent=1 // pred_check_branch
      %68 = sbr.rel (0) target = $region29
    $region28: #{tpu_custom_call.1} parent=1 // pred_region
      %69 = dma.done [#allocation6], 256
    $region29: #{tpu_custom_call.1} parent=1 // pred_fallthru
      _
    // Predicated region
    $region30: #{tpu_custom_call.1} parent=1 // pred_check
      _
    $region31: #{tpu_custom_call.1} parent=1 // pred_check_branch
      %71 = sbr.rel (0) target = $region33
    $region32: #{tpu_custom_call.1} parent=1 // pred_region
      %72 = dma.done [#allocation9], 256
    $region33: #{tpu_custom_call.1} parent=1 // pred_fallthru
      _
    %v73 = vld [vmem:[#allocation2] sm:$0xff]
    %v74 = vld [vmem:[#allocation2 + $0x8] sm:$0xff]
    %v75 = vld [vmem:[#allocation5] sm:$0xff]
    %v76 = vld [vmem:[#allocation5 + $0x8] sm:$0xff]
    %v77 = vmax.f32 %v73, %v75
    %v78 = vmax.f32 %v74, %v76
    %v79 = vld [vmem:[#allocation7] sm:$0xff]
    %v80 = vld [vmem:[#allocation7 + $0x8] sm:$0xff]
    %v81 = vmax.f32 %v77, %v79
    %v82 = vmax.f32 %v78, %v80
    %v83 = vld [vmem:[#allocation8] sm:$0xff]
    %v84 = vld [vmem:[#allocation8 + $0x8] sm:$0xff]
    %v85 = vmax.f32 %v81, %v83
    %v86 = vmax.f32 %v82, %v84
    %87 = vst [vmem:[#allocation10] sm:$0xff] %v85
    %88 = vst [vmem:[#allocation10 + $0x8] sm:$0xff] %v86
    // Predicated region
    $region34: #{tpu_custom_call.1} parent=1 // pred_check
      _
    $region35: #{tpu_custom_call.1} parent=1 // pred_check_branch
      %90 = sbr.rel (0) target = $region37
    $region36: #{tpu_custom_call.1} parent=1 // pred_region
      %s92 = ssub.s32 256, 256
      %93 = vsyncadd [#allocation4], %s92
      %s94 = sshll.u32 [#allocation10], 4
      %s95 = int_to_ptr.vmem [resolvable:$true] %s94
      %100 = dma.vmem_to_hbm [thread:$0]  %s95, 256, %s4, [#allocation4], 128, 128, 8
    $region37: #{tpu_custom_call.1} parent=1 // pred_fallthru
      _
    // Predicated region
    $region38: #{tpu_custom_call.1} parent=1 // pred_check
      _
    $region39: #{tpu_custom_call.1} parent=1 // pred_check_branch
      %102 = sbr.rel (0) target = $region41
    $region40: #{tpu_custom_call.1} parent=1 // pred_region
      %103 = dma.done [#allocation4], 256
    $region41: #{tpu_custom_call.1} parent=1 // pred_fallthru
      _
    %104 = vsyncpa [#allocation3], 1
    %105 = vsyncpa [#allocation6], 1
    %106 = vsyncpa [#allocation9], 1
    %107 = vsyncpa [#allocation4], 1

</llo_original>
